<compile_context>
chip_gen: v6e
topology: v6e:2x2x1
jax: 0.10.0
libtpu: 0.0.40
codegen_flags: <defaults>
</compile_context>

<pallas_src>
import functools

import jax
import jax.numpy as jnp
from jax.experimental import pallas as pl
from jax.experimental.pallas import tpu as pltpu


def _rmsnorm_kernel(x_ref, w_ref, b_ref, o_ref, *, eps: float):
    # x_ref: (nb, C, tl) block; w_ref, b_ref: (1, C, 1) broadcast along batch/lanes.
    x = x_ref[...].astype(jnp.float32)                       # (nb, C, tl)
    ms = jnp.mean(x * x, axis=1, keepdims=True)               # (nb, 1, tl) mean(x^2) over C
    inv = 1.0 / (jnp.sqrt(ms) + eps)                          # eps added to rms (module semantics)
    w = w_ref[...].astype(jnp.float32)                        # (1, C, 1)
    b = b_ref[...].astype(jnp.float32)                        # (1, C, 1)
    o_ref[...] = (x * inv * w + b).astype(o_ref.dtype)


def rms_norm_nchw(x, scale, offset, eps: float = 1e-6,
                  block_bytes: int = 6 * 1024 * 1024):
    """x: (N, C, H, W); scale, offset: (C,). Returns (N, C, H, W)."""
    N, C, H, W = x.shape
    L = H * W
    x3 = x.reshape(N, C, L)                 # contiguous reshape: no HBM traffic

    itemsize = jnp.dtype(x.dtype).itemsize
    row_bytes = C * itemsize                # bytes of one pixel-column across channels

    # Pipelined-footprint factor: 2x input + 2x output double-buffers, plus the
    # in-kernel f32 materialization(s) (x and the f32 result before the cast).
    fp_factor = 6 if itemsize >= 4 else 8
    # Keep total footprint under ~44 MiB (safe on v7x's 64 MiB VMEM per TC).
    block_bytes = min(block_bytes, (44 * 1024 * 1024) // fp_factor)

    # Lane tile: full L if it fits, else a multiple of 128 with a 512-lane
    # floor (>= 2 KiB DMA rows for f32).
    tl_target = max(512, (block_bytes // row_bytes) // 128 * 128)
    tl = L if L <= tl_target else tl_target

    # Batch tile: amortize the per-grid-step overhead when C*L is small.
    nb = min(N, max(1, block_bytes // (row_bytes * tl)))

    # Megacore (v7x has 2 TensorCores): make sure the grid has >= 2 steps when
    # the problem allows, first by splitting the batch tile, then the lane tile.
    def n_steps(nb_, tl_):
        return ((N + nb_ - 1) // nb_) * ((L + tl_ - 1) // tl_)

    while n_steps(nb, tl) < 2 and nb > 1:
        nb = (nb + 1) // 2
    if n_steps(nb, tl) < 2 and L > 128 and tl > 128:
        tl = max(128, (((tl + 1) // 2) + 127) // 128 * 128)

    grid = (pl.cdiv(N, nb), pl.cdiv(L, tl))

    # Explicit scoped-VMEM limit sized from the footprint (raises v5e's 16 MiB
    # default, stays well under v7x's 64 MiB physical VMEM).
    vmem_limit = int(min(48 * 1024 * 1024,
                         max(32 * 1024 * 1024,
                             fp_factor * block_bytes + 2 * 1024 * 1024)))

    w3 = scale.reshape(1, C, 1)
    b3 = offset.reshape(1, C, 1)

    kernel = functools.partial(_rmsnorm_kernel, eps=eps)
    out3 = pl.pallas_call(
        kernel,
        out_shape=jax.ShapeDtypeStruct((N, C, L), x.dtype),
        grid_spec=pltpu.PrefetchScalarGridSpec(
            num_scalar_prefetch=0,
            grid=grid,
            in_specs=[
                pl.BlockSpec((nb, C, tl), lambda n, l: (n, 0, l)),
                pl.BlockSpec((1, C, 1), lambda n, l: (0, 0, 0)),
                pl.BlockSpec((1, C, 1), lambda n, l: (0, 0, 0)),
            ],
            out_specs=pl.BlockSpec((nb, C, tl), lambda n, l: (n, 0, l)),
        ),
        compiler_params=pltpu.CompilerParams(
            dimension_semantics=("parallel", "parallel"),
            vmem_limit_bytes=vmem_limit),
    )(x3, w3, b3)

    return out3.reshape(N, C, H, W)


def _reference(x, scale, offset, eps=1e-6):
    # Direct transcription of the PyTorch forward.
    norm_x = jnp.sqrt(jnp.sum(x * x, axis=1, keepdims=True))
    rms_x = norm_x * (x.shape[1] ** (-0.5))
    x_normed = x / (rms_x + eps)
    return scale[None, :, None, None] * x_normed + offset[None, :, None, None]


if __name__ == "__main__":
    key = jax.random.PRNGKey(0)
    k1, k2, k3, k4 = jax.random.split(key, 4)

    # Primary small example: N=2, C=64 (dim=64), H=W=8.
    # Exercises the batch-tile path (small L) and the megacore >=2-step split.
    N, C, H, W = 2, 64, 8, 8
    x = jax.random.normal(k1, (N, C, H, W), dtype=jnp.float32)
    scale = 1.0 + 0.1 * jax.random.normal(k2, (C,), dtype=jnp.float32)
    offset = 0.05 * jax.random.normal(k3, (C,), dtype=jnp.float32)

    out = jax.block_until_ready(rms_norm_nchw(x, scale, offset, eps=1e-6))
    ref = _reference(x, scale, offset, eps=1e-6)
    assert out.shape == (N, C, H, W)
    assert jnp.allclose(out, ref, atol=1e-5, rtol=1e-5), float(jnp.max(jnp.abs(out - ref)))

    # Secondary check: multi-step grid along the spatial axis with a ragged
    # last lane tile (L = 592 -> tl = 512 + masked 80 tail), different C.
    N2, C2, H2, W2 = 1, 48, 16, 37
    x2 = jax.random.normal(k4, (N2, C2, H2, W2), dtype=jnp.float32)
    s2 = jnp.linspace(0.5, 1.5, C2, dtype=jnp.float32)
    b2 = jnp.linspace(-0.1, 0.1, C2, dtype=jnp.float32)
    out2 = jax.block_until_ready(
        rms_norm_nchw(x2, s2, b2, eps=1e-6, block_bytes=C2 * 512 * 4))
    ref2 = _reference(x2, s2, b2, eps=1e-6)
    assert jnp.allclose(out2, ref2, atol=1e-5, rtol=1e-5), float(jnp.max(jnp.abs(out2 - ref2)))

    print("KERNEL_OK")
</pallas_src>

<mosaic_0001>
module attributes {stable_mosaic.version = 11 : i64} {
  func.func @_rmsnorm_kernel(%arg0: i32, %arg1: i32, %arg2: memref<1x64x64xf32, #tpu.memory_space<vmem>>, %arg3: memref<1x64x1xf32, #tpu.memory_space<vmem>>, %arg4: memref<1x64x1xf32, #tpu.memory_space<vmem>>, %arg5: memref<1x64x64xf32, #tpu.memory_space<vmem>>) attributes {dimension_semantics = [#tpu.dimension_semantics<parallel>, #tpu.dimension_semantics<parallel>], iteration_bounds = array<i64: 2, 1>, scalar_prefetch = 0 : i64, scratch_operands = 0 : i64, tpu.core_type = #tpu.core_type<tc>, window_params = [{transform_indices = @transform_0, window_bounds = array<i64: 1, 64, 64>}, {pipeline_mode = #tpu.pipeline_mode<synchronous>, transform_indices = @transform_1, window_bounds = array<i64: 1, 64, 1>}, {pipeline_mode = #tpu.pipeline_mode<synchronous>, transform_indices = @transform_2, window_bounds = array<i64: 1, 64, 1>}, {transform_indices = @transform_3, window_bounds = array<i64: 1, 64, 64>}]} {
    %c0 = arith.constant 0 : index
    %c0_0 = arith.constant 0 : index
    %c0_1 = arith.constant 0 : index
    %0 = vector.load %arg2[%c0, %c0_0, %c0_1] : memref<1x64x64xf32, #tpu.memory_space<vmem>>, vector<1x64x64xf32>
    %1 = arith.mulf %0, %0 : vector<1x64x64xf32>
    %cst = arith.constant dense<0.000000e+00> : vector<1x64xf32>
    %2 = vector.multi_reduction <add>, %1, %cst [1] : vector<1x64x64xf32> to vector<1x64xf32>
    %3 = vector.shape_cast %2 : vector<1x64xf32> to vector<1x1x64xf32>
    %cst_2 = arith.constant 6.400000e+01 : f32
    %4 = vector.broadcast %cst_2 : f32 to vector<1x1x64xf32>
    %5 = arith.divf %3, %4 : vector<1x1x64xf32>
    %6 = math.sqrt %5 : vector<1x1x64xf32>
    %cst_3 = arith.constant 9.99999997E-7 : f32
    %7 = vector.broadcast %cst_3 : f32 to vector<1x1x64xf32>
    %8 = arith.addf %6, %7 : vector<1x1x64xf32>
    %cst_4 = arith.constant 1.000000e+00 : f32
    %9 = vector.broadcast %cst_4 : f32 to vector<1x1x64xf32>
    %10 = arith.divf %9, %8 : vector<1x1x64xf32>
    %c0_5 = arith.constant 0 : index
    %c0_6 = arith.constant 0 : index
    %c0_7 = arith.constant 0 : index
    %11 = vector.load %arg3[%c0_5, %c0_6, %c0_7] : memref<1x64x1xf32, #tpu.memory_space<vmem>>, vector<1x64x1xf32>
    %c0_8 = arith.constant 0 : index
    %c0_9 = arith.constant 0 : index
    %c0_10 = arith.constant 0 : index
    %12 = vector.load %arg4[%c0_8, %c0_9, %c0_10] : memref<1x64x1xf32, #tpu.memory_space<vmem>>, vector<1x64x1xf32>
    %13 = vector.broadcast %10 : vector<1x1x64xf32> to vector<1x64x64xf32>
    %14 = arith.mulf %0, %13 : vector<1x64x64xf32>
    %15 = vector.broadcast %11 : vector<1x64x1xf32> to vector<1x64x64xf32>
    %16 = arith.mulf %14, %15 : vector<1x64x64xf32>
    %17 = vector.broadcast %12 : vector<1x64x1xf32> to vector<1x64x64xf32>
    %18 = arith.addf %16, %17 : vector<1x64x64xf32>
    %c0_11 = arith.constant 0 : index
    %c0_12 = arith.constant 0 : index
    %c0_13 = arith.constant 0 : index
    %19 = vector.load %arg5[%c0_11, %c0_12, %c0_13] : memref<1x64x64xf32, #tpu.memory_space<vmem>>, vector<1x64x64xf32>
    tpu.vector_store %arg5[%c0_11, %c0_12, %c0_13], %18 {strides = array<i32>} : memref<1x64x64xf32, #tpu.memory_space<vmem>>, vector<1x64x64xf32>,
    return
  }
  func.func @transform_0(%arg0: i32, %arg1: i32) -> (i32, i32, i32) {
    %c0_i32 = arith.constant 0 : i32
    %c0_i32_0 = arith.constant 0 : i32
    return %arg0, %c0_i32, %arg1 : i32, i32, i32
  }
  func.func @transform_1(%arg0: i32, %arg1: i32) -> (i32, i32, i32) {
    %c0_i32 = arith.constant 0 : i32
    %c0_i32_0 = arith.constant 0 : i32
    %c0_i32_1 = arith.constant 0 : i32
    %c0_i32_2 = arith.constant 0 : i32
    return %c0_i32, %c0_i32_0, %c0_i32_1 : i32, i32, i32
  }
  func.func @transform_2(%arg0: i32, %arg1: i32) -> (i32, i32, i32) {
    %c0_i32 = arith.constant 0 : i32
    %c0_i32_0 = arith.constant 0 : i32
    %c0_i32_1 = arith.constant 0 : i32
    %c0_i32_2 = arith.constant 0 : i32
    return %c0_i32, %c0_i32_0, %c0_i32_1 : i32, i32, i32
  }
  func.func @transform_3(%arg0: i32, %arg1: i32) -> (i32, i32, i32) {
    %c0_i32 = arith.constant 0 : i32
    %c0_i32_0 = arith.constant 0 : i32
    return %arg0, %c0_i32, %arg1 : i32, i32, i32
  }
}

</mosaic_0001>

<llo_original>
// kernel: tpu_custom_call.1
$region0: #{tpu_custom_call.1}
  #allocation0 [shape = 'u32[]', space=smem, size = 0x4, offset = 0x4, fixed_abs, tag = 'smem constant byte address 0x4 - core index']
  #allocation1 [shape = 'u32[144,128]{1,0:T(1,128)}', space=vmem, size = 0x12000, scoped, tag = 'internal scratch']
  %s0 = inlined_call_operand.vmem [shape: f32[2,64,64], index: 0, kind: input, shape index: {}]
  %s1 = inlined_call_operand.vmem [shape: f32[1,64,1], index: 1, kind: input, shape index: {}]
  %s2 = inlined_call_operand.vmem [shape: f32[1,64,1], index: 2, kind: input, shape index: {}]
  %s3 = inlined_call_operand.hbm [shape: f32[2,64,64], index: 3, kind: output, shape index: {}]
  %s4 = sld [smem:[#allocation0]]
  $region45: #{tpu_custom_call.1} parent=0
    _
  %s6 = ssub.s32 1, %s4
  %s7 = scalar_select 0, %s6, %s4
  $region1: #{tpu_custom_call.1} parent=0
    #allocation2 [shape = 'u8[65536]{0}', space=vmem, size = 0x10000, scoped, tag = 'output window, operand 0']
    #allocation3 [shape = 's32[2]{0}', space=sflag, size = 0x8, scoped, tag = 'scoped memory for tpu_custom_call.1']
    %8 = vsyncpa [#allocation3], 0
    %s9 = scalar_lea.sflag [#allocation3], 1
    %10 = vsyncpa %s9, 0
    loop: start=0, step=1, limit=4
    $region2: #{tpu_custom_call.1} parent=1 // loop_pre_header
      _
    $region3: #{tpu_custom_call.1} parent=1 // loop_header
      %s12 = sphi 0, %s16
      %p13 = scmp.ge.s32.totalorder %s12, 4
      %s19 = sphi 0, %s31
      %s20 = sphi 0, %s27
      %s21 = sphi 0, %s19
      %s22 = sphi 0, %s20
      %s23 = sphi 0, %s21
      %s24 = sphi 0, %s22
      %s36 = sphi 0, %s38
      %s39 = sphi 0, %s36
      %s40 = sphi 0, %s39
      %s56 = sphi 0, %s40
      %s60 = sphi 0, %s60
      %s62 = sphi 0, %s60
      %s63 = sphi 0, %s62
      %s77 = sphi 0, %s63
      %s81 = sphi 0, %s81
      %s83 = sphi 0, %s81
      %s84 = sphi 0, %s83
      %s98 = sphi 0, %s84
      %s106 = sphi 0, %s108
      %s109 = sphi 0, %s106
      %s110 = sphi 0, %s109
      %s126 = sphi 0, %s110
    $region4: #{tpu_custom_call.1} parent=1 // loop_header_branch
      %15 = sbr.rel (%p13) target = $region8
    $region5: #{tpu_custom_call.1} parent=1 // loop_body
      %s17 = ssub.s32 %s12, 1
      %s18 = ssub.s32 %s12, 2
      %s25 = sadd.s32 1, %s20
      %p26 = scmp.ge.s32.totalorder %s25, 1
      %s27 = scalar_select %p26, 0, %s25
      %s28 = sadd.s32 1, %s19
      %s29 = scalar_select %p26, %s28, %s19
      %p30 = scmp.ge.s32.totalorder %s29, 2
      %s31 = scalar_select %p30, 0, %s29
      %s32 = ssub.s32 %s19, %s31
      %s33 = ssub.s32 %s20, %s27
      %s34 = sor.u32 %s32, %s33
      %p35 = scmp.eq.s32.totalorder %s34, 0
      %s37 = sadd.s32 %s36, 1
      %s38 = scalar_select %p35, %s36, %s37
      %p41 = pneg %p35
      %p42 = scmp.eq.s32.totalorder %s12, 1
      %p43 = por %p41, %p42
      %p44 = scmp.ne.s32.totalorder %s36, %s39
      %p45 = scmp.eq.s32.totalorder %s12, 0
      %p46 = por %p44, %p45
      %p47 = scmp.ne.s32.totalorder %s36, %s39
      %p48 = scmp.eq.s32.totalorder %s17, 1
      %p49 = por %p47, %p48
      %p50 = scmp.ne.s32.totalorder %s39, %s40
      %p51 = scmp.eq.s32.totalorder %s17, 0
      %p52 = por %p50, %p51
      %p53 = scmp.ne.s32.totalorder %s39, %s40
      %p54 = scmp.eq.s32.totalorder %s18, 1
      %p55 = por %p53, %p54
      %p57 = scmp.ne.s32.totalorder %s40, %s56
      %p58 = scmp.eq.s32.totalorder %s18, 0
      %p59 = por %p57, %p58
      %s61 = sadd.s32 %s60, 1
      %p64 = scmp.eq.s32.totalorder %s12, 1
      %p65 = scmp.ne.s32.totalorder %s60, %s62
      %p66 = scmp.eq.s32.totalorder %s12, 0
      %p67 = por %p65, %p66
      %p68 = scmp.ne.s32.totalorder %s60, %s62
      %p69 = scmp.eq.s32.totalorder %s17, 1
      %p70 = por %p68, %p69
      %p71 = scmp.ne.s32.totalorder %s62, %s63
      %p72 = scmp.eq.s32.totalorder %s17, 0
      %p73 = por %p71, %p72
      %p74 = scmp.ne.s32.totalorder %s62, %s63
      %p75 = scmp.eq.s32.totalorder %s18, 1
      %p76 = por %p74, %p75
      %p78 = scmp.ne.s32.totalorder %s63, %s77
      %p79 = scmp.eq.s32.totalorder %s18, 0
      %p80 = por %p78, %p79
      %s82 = sadd.s32 %s81, 1
      %p85 = scmp.eq.s32.totalorder %s12, 1
      %p86 = scmp.ne.s32.totalorder %s81, %s83
      %p87 = scmp.eq.s32.totalorder %s12, 0
      %p88 = por %p86, %p87
      %p89 = scmp.ne.s32.totalorder %s81, %s83
      %p90 = scmp.eq.s32.totalorder %s17, 1
      %p91 = por %p89, %p90
      %p92 = scmp.ne.s32.totalorder %s83, %s84
      %p93 = scmp.eq.s32.totalorder %s17, 0
      %p94 = por %p92, %p93
      %p95 = scmp.ne.s32.totalorder %s83, %s84
      %p96 = scmp.eq.s32.totalorder %s18, 1
      %p97 = por %p95, %p96
      %p99 = scmp.ne.s32.totalorder %s84, %s98
      %p100 = scmp.eq.s32.totalorder %s18, 0
      %p101 = por %p99, %p100
      %s102 = ssub.s32 %s19, %s31
      %s103 = ssub.s32 %s20, %s27
      %s104 = sor.u32 %s102, %s103
      %p105 = scmp.eq.s32.totalorder %s104, 0
      %s107 = sadd.s32 %s106, 1
      %s108 = scalar_select %p105, %s106, %s107
      %p111 = pneg %p105
      %p112 = scmp.eq.s32.totalorder %s12, 1
      %p113 = por %p111, %p112
      %p114 = scmp.ne.s32.totalorder %s106, %s109
      %p115 = scmp.eq.s32.totalorder %s12, 0
      %p116 = por %p114, %p115
      %p117 = scmp.ne.s32.totalorder %s106, %s109
      %p118 = scmp.eq.s32.totalorder %s17, 1
      %p119 = por %p117, %p118
      %p120 = scmp.ne.s32.totalorder %s109, %s110
      %p121 = scmp.eq.s32.totalorder %s17, 0
      %p122 = por %p120, %p121
      %p123 = scmp.ne.s32.totalorder %s109, %s110
      %p124 = scmp.eq.s32.totalorder %s18, 1
      %p125 = por %p123, %p124
      %p127 = scmp.ne.s32.totalorder %s110, %s126
      %p128 = scmp.eq.s32.totalorder %s18, 0
      %p129 = por %p127, %p128
      %p130 = scmp.le.s32.totalorder 1, %s12
      %p131 = scmp.lt.s32.totalorder %s12, 3
      %p132 = pnand %p130, %p131
      %p133 = pneg %p132
      // Predicated region
      $region9: #{tpu_custom_call.1} parent=5 // pred_check
        _
      $region10: #{tpu_custom_call.1} parent=5 // pred_check_branch
        %135 = sbr.rel (%p132) target = $region12
      $region11: #{tpu_custom_call.1} parent=5 // pred_region
        %s136 = ssub.s32 %s12, 1
        // Predicated region
        $region13: #{tpu_custom_call.1} parent=11 // pred_check
          %p137 = pneg %p73
        $region14: #{tpu_custom_call.1} parent=11 // pred_check_branch
          %139 = sbr.rel (%p137) target = $region16
        $region15: #{tpu_custom_call.1} parent=11 // pred_region
          _
        $region16: #{tpu_custom_call.1} parent=11 // pred_fallthru
          _
        // Predicated region
        $region17: #{tpu_custom_call.1} parent=11 // pred_check
          %p140 = pneg %p94
        $region18: #{tpu_custom_call.1} parent=11 // pred_check_branch
          %142 = sbr.rel (%p140) target = $region20
        $region19: #{tpu_custom_call.1} parent=11 // pred_region
          _
        $region20: #{tpu_custom_call.1} parent=11 // pred_fallthru
          _
      $region12: #{tpu_custom_call.1} parent=5 // pred_fallthru
        _
      %p143 = scmp.lt.s32.totalorder %s12, 2
      // Predicated region
      $region21: #{tpu_custom_call.1} parent=5 // pred_check
        %p144 = pneg %p143
      $region22: #{tpu_custom_call.1} parent=5 // pred_check_branch
        %146 = sbr.rel (%p144) target = $region24
      $region23: #{tpu_custom_call.1} parent=5 // pred_region
        // Predicated region
        $region25: #{tpu_custom_call.1} parent=23 // pred_check
          %p147 = pneg %p46
        $region26: #{tpu_custom_call.1} parent=23 // pred_check_branch
          %149 = sbr.rel (%p147) target = $region28
        $region27: #{tpu_custom_call.1} parent=23 // pred_region
          %p150 = scmp.lt.s32.totalorder %s19, 1
          %s151 = scalar_select %p150, %s19, 1
          %p152 = scmp.lt.s32.totalorder %s20, 0
          %s153 = scalar_select %p152, %s20, 0
          %s154 = smul.addr %s151, 8
          %s155 = sadd.s32 %s153, %s154
          %s156 = smul.addr %s155, 8
          %s157 = scalar_lea.vmem %s0, %s156
        $region28: #{tpu_custom_call.1} parent=23 // pred_fallthru
          _
      $region24: #{tpu_custom_call.1} parent=5 // pred_fallthru
        _
      %p158 = scmp.le.s32.totalorder 1, %s12
      %p159 = scmp.lt.s32.totalorder %s12, 3
      %p160 = pnand %p158, %p159
      %p161 = pneg %p160
      // Predicated region
      $region29: #{tpu_custom_call.1} parent=5 // pred_check
        _
      $region30: #{tpu_custom_call.1} parent=5 // pred_check_branch
        %163 = sbr.rel (%p160) target = $region32
      $region31: #{tpu_custom_call.1} parent=5 // pred_region
        %s164 = ssub.s32 %s12, 1
        %p165 = scmp.lt.s32.totalorder %s21, 1
        %s166 = scalar_select %p165, %s21, 1
        %p167 = scmp.lt.s32.totalorder %s22, 0
        %s168 = scalar_select %p167, %s22, 0
        %s169 = smul.addr %s166, 8
        %s170 = sadd.s32 %s168, %s169
        %s171 = smul.addr %s170, 8
        %s172 = scalar_lea.vmem %s0, %s171
        %p173 = pneg %p52
        %p174 = pneg %p49
        %p175 = pneg %p73
        %p176 = pneg %p70
        %p177 = pneg %p94
        %p178 = pneg %p91
        %p179 = pneg %p122
        %p180 = pneg %p119
        %s181 = sand.u32 %s109, 1
        %s182 = scalar_lea.sflag [#allocation3], %s181
        %s183 = sand.u32 %s109, 1
        %s184 = smul.addr %s183, 64
        %s185 = scalar_lea.vmem [#allocation2], %s184
        %p186 = scmp.lt.s32.totalorder %s21, 1
        %s187 = scalar_select %p186, %s21, 1
        %p188 = scmp.lt.s32.totalorder %s22, 0
        %s189 = scalar_select %p188, %s22, 0
        %s190 = smul.addr %s187, 8
        %s191 = sadd.s32 %s189, %s190
        %s192 = smul.addr %s191, 8
        %s193 = scalar_lea.vmem %s0, %s192
        %v194 = vld [vmem:[%s193] sm:$0xff]
        %v195 = vld [vmem:[%s193 + $0x8] sm:$0xff]
        %v196 = vld [vmem:[%s193 + $0x10] sm:$0xff]
        %v197 = vld [vmem:[%s193 + $0x18] sm:$0xff]
        %v198 = vld [vmem:[%s193 + $0x20] sm:$0xff]
        %v199 = vld [vmem:[%s193 + $0x28] sm:$0xff]
        %v200 = vld [vmem:[%s193 + $0x30] sm:$0xff]
        %v201 = vld [vmem:[%s193 + $0x38] sm:$0xff]
        %v202 = vmul.f32 %v194, %v194
        %v203 = vmul.f32 %v195, %v195
        %v204 = vmul.f32 %v196, %v196
        %v205 = vmul.f32 %v197, %v197
        %v206 = vmul.f32 %v198, %v198
        %v207 = vmul.f32 %v199, %v199
        %v208 = vmul.f32 %v200, %v200
        %v209 = vmul.f32 %v201, %v201
        %vm210 = vcmask 523264
        %v211 = vsel %vm210, %v202, 0.0
        %v212 = vsel %vm210, %v203, 0.0
        %v213 = vadd.f32 %v211, %v212
        %v214 = vsel %vm210, %v204, 0.0
        %v215 = vadd.f32 %v213, %v214
        %v216 = vsel %vm210, %v205, 0.0
        %v217 = vadd.f32 %v215, %v216
        %v218 = vsel %vm210, %v206, 0.0
        %v219 = vadd.f32 %v217, %v218
        %v220 = vsel %vm210, %v207, 0.0
        %v221 = vadd.f32 %v219, %v220
        %v222 = vsel %vm210, %v208, 0.0
        %v223 = vadd.f32 %v221, %v222
        %v224 = vsel %vm210, %v209, 0.0
        %v225 = vadd.f32 %v223, %v224
        %v226 = vrot.slane %v225, 4
        %v227 = vadd.f32 %v225, %v226
        %v228 = vrot.slane %v227, 2
        %v229 = vadd.f32 %v227, %v228
        %v230 = vrot.slane %v229, 1
        %v231 = vadd.f32 %v229, %v230
        %v232 = vrcp.pop 64.0
        %v233 = vmul.f32 %v231, %v232
        %v234 = vrsqrt.pop %v233
        %v235 = vmul.f32 %v233, %v234
        %vm236 = vcmp.eq.f32.partialorder %v233, inf
        %v237 = vsel %vm236, %v233, %v235
        %vm238 = vcmp.eq.f32.partialorder %v233, 0.0
        %v239 = vand.u32 %v233, 2147483648
        %v240 = vsel %vm238, %v239, %v237
        %v241 = vadd.f32 %v240, 1e-06
        %v242 = vrcp.pop %v241
        %v243 = vmul.f32 1.0, %v242
        %v244 = vld [vmem:[%s1] sm:$0xff]
        %v245 = vld [vmem:[%s1 + $0x8] sm:$0xff]
        %v246 = vld [vmem:[%s1 + $0x10] sm:$0xff]
        %v247 = vld [vmem:[%s1 + $0x18] sm:$0xff]
        %v248 = vld [vmem:[%s1 + $0x20] sm:$0xff]
        %v249 = vld [vmem:[%s1 + $0x28] sm:$0xff]
        %v250 = vld [vmem:[%s1 + $0x30] sm:$0xff]
        %v251 = vld [vmem:[%s1 + $0x38] sm:$0xff]
        %v252 = vld [vmem:[%s2] sm:$0xff]
        %v253 = vld [vmem:[%s2 + $0x8] sm:$0xff]
        %v254 = vld [vmem:[%s2 + $0x10] sm:$0xff]
        %v255 = vld [vmem:[%s2 + $0x18] sm:$0xff]
        %v256 = vld [vmem:[%s2 + $0x20] sm:$0xff]
        %v257 = vld [vmem:[%s2 + $0x28] sm:$0xff]
        %v258 = vld [vmem:[%s2 + $0x30] sm:$0xff]
        %v259 = vld [vmem:[%s2 + $0x38] sm:$0xff]
        %v260 = vmul.f32 %v194, %v243
        %v261 = vmul.f32 %v195, %v243
        %v262 = vmul.f32 %v196, %v243
        %v263 = vmul.f32 %v197, %v243
        %v264 = vmul.f32 %v198, %v243
        %v265 = vmul.f32 %v199, %v243
        %v266 = vmul.f32 %v200, %v243
        %v267 = vmul.f32 %v201, %v243
        %269 = vset.pattern.permute.xlu0 0
        %270 = vperm.xlu0 %269, %v244
        %v271 = vpop.permute.xlu0 %270
        %274 = vset.pattern.permute.xlu0 0
        %275 = vperm.xlu0 %274, %v245
        %v276 = vpop.permute.xlu0 %275
        %279 = vset.pattern.permute.xlu0 0
        %280 = vperm.xlu0 %279, %v246
        %v281 = vpop.permute.xlu0 %280
        %284 = vset.pattern.permute.xlu0 0
        %285 = vperm.xlu0 %284, %v247
        %v286 = vpop.permute.xlu0 %285
        %289 = vset.pattern.permute.xlu0 0
        %290 = vperm.xlu0 %289, %v248
        %v291 = vpop.permute.xlu0 %290
        %294 = vset.pattern.permute.xlu0 0
        %295 = vperm.xlu0 %294, %v249
        %v296 = vpop.permute.xlu0 %295
        %299 = vset.pattern.permute.xlu0 0
        %300 = vperm.xlu0 %299, %v250
        %v301 = vpop.permute.xlu0 %300
        %304 = vset.pattern.permute.xlu0 0
        %305 = vperm.xlu0 %304, %v251
        %v306 = vpop.permute.xlu0 %305
        %v308 = vmul.f32 %v260, %v271
        %v309 = vmul.f32 %v261, %v276
        %v310 = vmul.f32 %v262, %v281
        %v311 = vmul.f32 %v263, %v286
        %v312 = vmul.f32 %v264, %v291
        %v313 = vmul.f32 %v265, %v296
        %v314 = vmul.f32 %v266, %v301
        %v315 = vmul.f32 %v267, %v306
        %317 = vset.pattern.permute.xlu0 0
        %318 = vperm.xlu0 %317, %v252
        %v319 = vpop.permute.xlu0 %318
        %322 = vset.pattern.permute.xlu0 0
        %323 = vperm.xlu0 %322, %v253
        %v324 = vpop.permute.xlu0 %323
        %327 = vset.pattern.permute.xlu0 0
        %328 = vperm.xlu0 %327, %v254
        %v329 = vpop.permute.xlu0 %328
        %332 = vset.pattern.permute.xlu0 0
        %333 = vperm.xlu0 %332, %v255
        %v334 = vpop.permute.xlu0 %333
        %337 = vset.pattern.permute.xlu0 0
        %338 = vperm.xlu0 %337, %v256
        %v339 = vpop.permute.xlu0 %338
        %342 = vset.pattern.permute.xlu0 0
        %343 = vperm.xlu0 %342, %v257
        %v344 = vpop.permute.xlu0 %343
        %347 = vset.pattern.permute.xlu0 0
        %348 = vperm.xlu0 %347, %v258
        %v349 = vpop.permute.xlu0 %348
        %352 = vset.pattern.permute.xlu0 0
        %353 = vperm.xlu0 %352, %v259
        %v354 = vpop.permute.xlu0 %353
        %v356 = vadd.f32 %v308, %v319
        %v357 = vadd.f32 %v309, %v324
        %v358 = vadd.f32 %v310, %v329
        %v359 = vadd.f32 %v311, %v334
        %v360 = vadd.f32 %v312, %v339
        %v361 = vadd.f32 %v313, %v344
        %v362 = vadd.f32 %v314, %v349
        %v363 = vadd.f32 %v315, %v354
        %364 = vst.msk [vmem:[%s185] sm:$0xff] %vm210, %v356
        %365 = vst.msk [vmem:[%s185 + $0x8] sm:$0xff] %vm210, %v357
        %366 = vst.msk [vmem:[%s185 + $0x10] sm:$0xff] %vm210, %v358
        %367 = vst.msk [vmem:[%s185 + $0x18] sm:$0xff] %vm210, %v359
        %368 = vst.msk [vmem:[%s185 + $0x20] sm:$0xff] %vm210, %v360
        %369 = vst.msk [vmem:[%s185 + $0x28] sm:$0xff] %vm210, %v361
        %370 = vst.msk [vmem:[%s185 + $0x30] sm:$0xff] %vm210, %v362
        %371 = vst.msk [vmem:[%s185 + $0x38] sm:$0xff] %vm210, %v363
        %s372 = sand.u32 %s109, 1
        %s373 = scalar_lea.sflag [#allocation3], %s372
        %s374 = sand.u32 %s109, 1
        %s375 = smul.addr %s374, 64
        %s376 = scalar_lea.vmem [#allocation2], %s375
        // Predicated region
        $region33: #{tpu_custom_call.1} parent=31 // pred_check
          %p377 = pneg %p119
        $region34: #{tpu_custom_call.1} parent=31 // pred_check_branch
          %379 = sbr.rel (%p377) target = $region36
        $region35: #{tpu_custom_call.1} parent=31 // pred_region
          %s381 = ssub.s32 1024, 1024
          %382 = vsyncadd %s373, %s381
          %s383 = smul.addr %s21, 8
          %s384 = sadd.s32 %s22, %s383
          %s385 = smul.addr %s384, 128
          %s386 = scalar_lea.hbm %s3, %s385
          %s387 = sshll.u32 %s376, 4
          %s388 = int_to_ptr.vmem [resolvable:$true] %s387
          %393 = dma.vmem_to_hbm [thread:$0]  %s388, 1024, %s386, %s373, 128, 128, 8
        $region36: #{tpu_custom_call.1} parent=31 // pred_fallthru
          _
      $region32: #{tpu_custom_call.1} parent=5 // pred_fallthru
        _
      %p394 = scmp.le.s32.totalorder 2, %s12
      // Predicated region
      $region37: #{tpu_custom_call.1} parent=5 // pred_check
        %p395 = pneg %p394
      $region38: #{tpu_custom_call.1} parent=5 // pred_check_branch
        %397 = sbr.rel (%p395) target = $region40
      $region39: #{tpu_custom_call.1} parent=5 // pred_region
        %s398 = ssub.s32 %s12, 2
        // Predicated region
        $region41: #{tpu_custom_call.1} parent=39 // pred_check
          %p399 = pneg %p125
        $region42: #{tpu_custom_call.1} parent=39 // pred_check_branch
          %401 = sbr.rel (%p399) target = $region44
        $region43: #{tpu_custom_call.1} parent=39 // pred_region
          %s402 = sand.u32 %s110, 1
          %s403 = scalar_lea.sflag [#allocation3], %s402
          %s404 = sand.u32 %s110, 1
          %s405 = smul.addr %s404, 64
          %s406 = scalar_lea.vmem [#allocation2], %s405
          %407 = dma.done %s403, 1024
        $region44: #{tpu_custom_call.1} parent=39 // pred_fallthru
          _
      $region40: #{tpu_custom_call.1} parent=5 // pred_fallthru
        _
    $region6: #{tpu_custom_call.1} parent=1 // loop_footer
      %s16 = sadd.s32 1, %s12
    $region7: #{tpu_custom_call.1} parent=1 // loop_footer_branch
      %11 = sbr.rel target = $region3
    $region8: #{tpu_custom_call.1} parent=1 // loop_exit
      _
    %408 = vsyncpa [#allocation3], 1
    %s409 = scalar_lea.sflag [#allocation3], 1
    %410 = vsyncpa %s409, 1

</llo_original>
